<compile_context>
chip_gen: v7x
topology: tpu7x:2x2x1
jax: 0.10.0
libtpu: 0.0.40
codegen_flags: <defaults>
</compile_context>

<pallas_src>
import functools

import jax
import jax.numpy as jnp
from jax.experimental import pallas as pl
from jax.experimental.pallas import tpu as pltpu


# ----------------------------------------------------------------------------
# helpers
# ----------------------------------------------------------------------------
def _round_up(n, m):
    return ((n + m - 1) // m) * m


def _pad_to(arr, shape):
    pads = [(0, s - d) for d, s in zip(arr.shape, shape)]
    return jnp.pad(arr, pads)


def _tpu_generation():
    try:
        kind = jax.devices()[0].device_kind.lower()
    except Exception:
        return "unknown"
    if "v5 lite" in kind or "v5e" in kind or "v5lite" in kind:
        return "v5e"
    if "v6" in kind or "trillium" in kind:
        return "v6e"
    if "v7" in kind or "7x" in kind:
        return "v7x"
    return "unknown"


def _vmem_capacity_bytes(gen):
    """Per-TensorCore VMEM capacity; prefer the runtime query, fall back to tables."""
    try:
        cap = int(pltpu.get_tpu_info().vmem_capacity_bytes)
        if cap > 0:
            return cap
    except Exception:
        pass
    if gen == "v7x":
        return 64 * 1024 * 1024
    if gen in ("v5e", "v6e"):
        return 128 * 1024 * 1024
    return 64 * 1024 * 1024  # unknown: be conservative


def _pick_tile(dim_pad, cap):
    """Largest multiple of 128 that divides dim_pad and is <= cap."""
    t = min(cap, dim_pad)
    while dim_pad % t != 0:
        t -= 128
    return t


# ----------------------------------------------------------------------------
# fused single-kernel path
# ----------------------------------------------------------------------------
def _fused_mlp_kernel(x_ref, *refs, n_layers, compute_dtype):
    """refs = (w0, b0, ..., w_{L-1}, b_{L-1}, out_ref).

    Whole forward for one batch tile runs in VMEM: bf16 MXU matmul per layer
    with f32 accumulation, f32 bias-add + ReLU on the VPU, activations cast
    back to the streaming dtype between layers, one lane-dense f32 store.
    """
    out_ref = refs[-1]
    act = x_ref[...]
    for i in range(n_layers):
        w = refs[2 * i][...]
        b = refs[2 * i + 1][...]
        y = jnp.dot(act, w, preferred_element_type=jnp.float32)
        y = y + b.astype(jnp.float32)
        if i < n_layers - 1:
            y = jnp.maximum(y, 0.0)            # hidden layers: ReLU
            act = y.astype(compute_dtype)      # back to MXU-native dtype
        else:
            act = y                            # final layer stays f32
    out_ref[...] = act.astype(out_ref.dtype)


_BUFFERED_WEIGHTS_OK = None  # cache: does this JAX accept pl.Buffered(1)?


def _fused_call(x_p, prepared, tm, n_tiles, resident_bytes, cap, buffered):
    weights = prepared["weights"]
    dims_pad = prepared["dims_pad"]
    n = len(weights)

    in_specs = [pl.BlockSpec((tm, dims_pad[0]), lambda i: (i, 0))]
    flat_inputs = [x_p]
    for w_p, b_p in weights:
        if buffered:
            # Constant block across the grid: a single VMEM buffer is enough.
            w_spec = pl.BlockSpec(w_p.shape, lambda i: (0, 0),
                                  pipeline_mode=pl.Buffered(1))
            b_spec = pl.BlockSpec(b_p.shape, lambda i: (0, 0),
                                  pipeline_mode=pl.Buffered(1))
        else:
            w_spec = pl.BlockSpec(w_p.shape, lambda i: (0, 0))
            b_spec = pl.BlockSpec(b_p.shape, lambda i: (0, 0))
        in_specs += [w_spec, b_spec]
        flat_inputs += [w_p, b_p]

    B_pad = tm * n_tiles
    flops = 2 * B_pad * sum(dims_pad[i] * dims_pad[i + 1] for i in range(n))
    bytes_accessed = (
        x_p.size * x_p.dtype.itemsize
        + sum(w.size * w.dtype.itemsize + b.size * b.dtype.itemsize
              for w, b in weights)
        + B_pad * dims_pad[-1] * 4
    )
    vmem_limit = int(min(max(2 * resident_bytes, 32 * 1024 * 1024),
                         int(0.9 * cap)))

    return pl.pallas_call(
        functools.partial(_fused_mlp_kernel, n_layers=n,
                          compute_dtype=prepared["compute_dtype"]),
        out_shape=jax.ShapeDtypeStruct((B_pad, dims_pad[-1]), jnp.float32),
        grid=(n_tiles,),
        in_specs=in_specs,
        out_specs=pl.BlockSpec((tm, dims_pad[-1]), lambda i: (i, 0)),
        compiler_params=pltpu.CompilerParams(
            dimension_semantics=("parallel",),
            vmem_limit_bytes=vmem_limit,
        ),
        cost_estimate=pl.CostEstimate(flops=flops, transcendentals=0,
                                      bytes_accessed=bytes_accessed),
    )(*flat_inputs)


def _fused_forward(x_p, prepared, tm, n_tiles, resident_bytes, cap):
    global _BUFFERED_WEIGHTS_OK
    tries = ([True, False] if _BUFFERED_WEIGHTS_OK is None
             else [_BUFFERED_WEIGHTS_OK])
    last_err = None
    for buffered in tries:
        try:
            out = _fused_call(x_p, prepared, tm, n_tiles, resident_bytes, cap,
                              buffered)
            out = jax.block_until_ready(out)
            _BUFFERED_WEIGHTS_OK = buffered
            return out
        except Exception as e:  # Buffered(1) unsupported -> retry default pipelining
            last_err = e
    raise last_err


# ----------------------------------------------------------------------------
# tiled per-layer fallback path (weights too big to keep fully resident)
# ----------------------------------------------------------------------------
def _tiled_linear_kernel(x_ref, w_ref, b_ref, o_ref, acc_ref, *, apply_relu):
    @pl.when(pl.program_id(2) == 0)
    def _():
        acc_ref[...] = jnp.zeros_like(acc_ref)

    acc_ref[...] += jnp.dot(x_ref[...], w_ref[...],
                            preferred_element_type=jnp.float32)

    @pl.when(pl.program_id(2) == pl.num_programs(2) - 1)
    def _():
        y = acc_ref[...] + b_ref[...].astype(jnp.float32)
        if apply_relu:
            y = jnp.maximum(y, 0.0)
        o_ref[...] = y.astype(o_ref.dtype)


def _tiled_linear(x_p, w_p, b_p, *, apply_relu, out_dtype, tm, tn, tk,
                  vmem_limit):
    M, K = x_p.shape
    _, N = w_p.shape
    grid = (M // tm, N // tn, K // tk)
    flops = 2 * M * N * K
    bytes_accessed = (x_p.size * x_p.dtype.itemsize
                      + w_p.size * w_p.dtype.itemsize
                      + b_p.size * b_p.dtype.itemsize
                      + M * N * jnp.dtype(out_dtype).itemsize)
    return pl.pallas_call(
        functools.partial(_tiled_linear_kernel, apply_relu=apply_relu),
        out_shape=jax.ShapeDtypeStruct((M, N), out_dtype),
        grid=grid,
        in_specs=[
            pl.BlockSpec((tm, tk), lambda i, j, k: (i, k)),
            pl.BlockSpec((tk, tn), lambda i, j, k: (k, j)),
            pl.BlockSpec((1, tn), lambda i, j, k: (0, j)),
        ],
        out_specs=pl.BlockSpec((tm, tn), lambda i, j, k: (i, j)),
        scratch_shapes=[pltpu.VMEM((tm, tn), jnp.float32)],
        compiler_params=pltpu.CompilerParams(
            dimension_semantics=("parallel", "parallel", "arbitrary"),
            vmem_limit_bytes=vmem_limit,
        ),
        cost_estimate=pl.CostEstimate(flops=flops, transcendentals=0,
                                      bytes_accessed=bytes_accessed),
    )(x_p, w_p, b_p)


def _tiled_forward(x_p, prepared, tm, cap):
    weights = prepared["weights"]
    cdt = prepared["compute_dtype"]
    n = len(weights)
    vmem_limit = int(0.9 * cap)
    act = x_p
    for i, (w_p, b_p) in enumerate(weights):
        K_pad, N_pad = w_p.shape
        tn = _pick_tile(N_pad, 512)
        tk = _pick_tile(K_pad, 512)
        last = i == n - 1
        out_dtype = jnp.float32 if last else cdt
        act = _tiled_linear(act, w_p, b_p, apply_relu=not last,
                            out_dtype=out_dtype, tm=tm, tn=tn, tk=tk,
                            vmem_limit=vmem_limit)
    return act


# ----------------------------------------------------------------------------
# public API
# ----------------------------------------------------------------------------
def prepare_mlp_params(params, compute_dtype=jnp.bfloat16):
    """Pad + cast parameters ONCE (hoisted out of the per-call forward)."""
    dims = [params[0][0].shape[0]] + [w.shape[1] for w, _ in params]
    dims_pad = [_round_up(d, 128) for d in dims]  # lane-dense feature dims
    prepared_weights = []
    for i, (w, b) in enumerate(params):
        w_p = _pad_to(w.astype(compute_dtype), (dims_pad[i], dims_pad[i + 1]))
        b_p = _pad_to(b.astype(compute_dtype).reshape(1, -1),
                      (1, dims_pad[i + 1]))
        prepared_weights.append((w_p, b_p))
    return {
        "weights": prepared_weights,
        "dims": dims,
        "dims_pad": dims_pad,
        "compute_dtype": compute_dtype,
    }


def mlp_forward(x, prepared, force_tiled=False):
    """MLP forward. x: (B, Din); prepared: output of prepare_mlp_params."""
    B, Din = x.shape
    dims, dims_pad = prepared["dims"], prepared["dims_pad"]
    assert Din == dims[0], "input feature size mismatch"
    cdt = prepared["compute_dtype"]

    gen = _tpu_generation()
    cap = _vmem_capacity_bytes(gen)

    # Batch tile: sublane unit 16 for bf16 (8 for f32); 256 rows on the
    # 2x256^2 MXUs (v6e/v7x), 128 on v5e. On v7x prefer >= 2 grid steps so
    # dimension_semantics=("parallel",) can actually use both TensorCores.
    unit = 16 if jnp.dtype(cdt).itemsize == 2 else 8
    tm_cap = 128 if gen == "v5e" else 256
    B_ceil = _round_up(B, unit)
    tm = min(tm_cap, B_ceil)
    if gen == "v7x" and B_ceil // tm < 2 and tm >= 2 * unit:
        tm = _round_up((B_ceil + 1) // 2, unit)
    B_pad = _round_up(B, tm)
    n_tiles = B_pad // tm

    # Conservative fused-path resident estimate (assumes double-buffered
    # weights, bf16 streaming operands, f32 intermediates + output).
    wb_bytes = sum(w.size * w.dtype.itemsize + b.size * b.dtype.itemsize
                   for w, b in prepared["weights"])
    resident = (2 * wb_bytes
                + 2 * tm * dims_pad[0] * jnp.dtype(cdt).itemsize
                + 2 * tm * dims_pad[-1] * 4
                + 2 * tm * max(dims_pad) * 4)
    fused_ok = (not force_tiled) and resident <= int(0.8 * cap)

    x_p = _pad_to(x.astype(cdt), (B_pad, dims_pad[0]))
    if fused_ok:
        out_pad = _fused_forward(x_p, prepared, tm, n_tiles, resident, cap)
    else:
        out_pad = _tiled_forward(x_p, prepared, tm, cap)

    # Strip batch / feature padding.
    return out_pad[:B, : dims[-1]].astype(x.dtype)


def init_mlp_params(key, input_size, hiddens, output_size, dtype=jnp.float32):
    """Deterministic parameter init matching nn.Linear shapes.

    PyTorch stores weight as (out, in); we keep the transposed (in, out) form
    so the kernel computes x @ W directly.
    """
    dims = [input_size] + list(hiddens) + [output_size]
    params = []
    for i in range(len(dims) - 1):
        fan_in, fan_out = dims[i], dims[i + 1]
        key, wk, bk = jax.random.split(key, 3)
        bound = 1.0 / jnp.sqrt(fan_in)
        w = jax.random.uniform(wk, (fan_in, fan_out), dtype, -bound, bound)
        b = jax.random.uniform(bk, (1, fan_out), dtype, -bound, bound)
        params.append((w, b))
    return params


def mlp_reference(x, params, compute_dtype=jnp.float32):
    """Pure-JAX reference using the same streaming dtype as the kernel."""
    out = x.astype(compute_dtype)
    n = len(params)
    for i, (w, b) in enumerate(params):
        out = jnp.dot(out, w.astype(compute_dtype),
                      preferred_element_type=jnp.float32)
        out = out + b.astype(compute_dtype).reshape(1, -1).astype(jnp.float32)
        if i < n - 1:
            out = jnp.maximum(out, 0.0).astype(compute_dtype)
    return out.astype(jnp.float32)


if __name__ == "__main__":
    key = jax.random.PRNGKey(0)
    batch = 2
    input_size = 16
    hiddens = [32, 32]
    output_size = 8

    pkey, xkey = jax.random.split(key)
    params = init_mlp_params(pkey, input_size, hiddens, output_size)
    prepared = prepare_mlp_params(params, compute_dtype=jnp.bfloat16)
    x = jax.random.normal(xkey, (batch, input_size), jnp.float32)

    # Fused single-kernel path.
    out = jax.block_until_ready(mlp_forward(x, prepared))

    # Matched-precision reference (bf16 operands, f32 accumulation).
    ref = mlp_reference(x, params, compute_dtype=jnp.bfloat16)
    assert out.shape == (batch, output_size)
    assert jnp.allclose(out, ref, atol=2e-3, rtol=2e-3), "fused mismatch vs. reference"

    # Also exercise the tiled fallback path (used for VMEM-oversized layers).
    out_tiled = jax.block_until_ready(mlp_forward(x, prepared, force_tiled=True))
    assert jnp.allclose(out_tiled, ref, atol=2e-3, rtol=2e-3), "tiled mismatch vs. reference"

    print("KERNEL_OK")
</pallas_src>

<mosaic_0001>
module attributes {stable_mosaic.version = 11 : i64} {
  func.func @_fused_mlp_kernel(%arg0: i32, %arg1: memref<16x128xbf16, #tpu.memory_space<vmem>>, %arg2: memref<128x128xbf16, #tpu.memory_space<vmem>>, %arg3: memref<1x128xbf16, #tpu.memory_space<vmem>>, %arg4: memref<128x128xbf16, #tpu.memory_space<vmem>>, %arg5: memref<1x128xbf16, #tpu.memory_space<vmem>>, %arg6: memref<128x128xbf16, #tpu.memory_space<vmem>>, %arg7: memref<1x128xbf16, #tpu.memory_space<vmem>>, %arg8: memref<16x128xf32, #tpu.memory_space<vmem>>) attributes {dimension_semantics = [#tpu.dimension_semantics<parallel>], iteration_bounds = array<i64: 1>, scalar_prefetch = 0 : i64, scratch_operands = 0 : i64, tpu.core_type = #tpu.core_type<tc>, window_params = [{transform_indices = @transform_0, window_bounds = array<i64: 16, 128>}, {pipeline_mode = #tpu.pipeline_mode<synchronous>, transform_indices = @transform_1, window_bounds = array<i64: 128, 128>}, {pipeline_mode = #tpu.pipeline_mode<synchronous>, transform_indices = @transform_2, window_bounds = array<i64: 1, 128>}, {pipeline_mode = #tpu.pipeline_mode<synchronous>, transform_indices = @transform_3, window_bounds = array<i64: 128, 128>}, {pipeline_mode = #tpu.pipeline_mode<synchronous>, transform_indices = @transform_4, window_bounds = array<i64: 1, 128>}, {pipeline_mode = #tpu.pipeline_mode<synchronous>, transform_indices = @transform_5, window_bounds = array<i64: 128, 128>}, {pipeline_mode = #tpu.pipeline_mode<synchronous>, transform_indices = @transform_6, window_bounds = array<i64: 1, 128>}, {transform_indices = @transform_7, window_bounds = array<i64: 16, 128>}]} {
    %c0 = arith.constant 0 : index
    %c0_0 = arith.constant 0 : index
    %0 = vector.load %arg1[%c0, %c0_0] : memref<16x128xbf16, #tpu.memory_space<vmem>>, vector<16x128xbf16>
    %c0_1 = arith.constant 0 : index
    %c0_2 = arith.constant 0 : index
    %1 = vector.load %arg2[%c0_1, %c0_2] : memref<128x128xbf16, #tpu.memory_space<vmem>>, vector<128x128xbf16>
    %c0_3 = arith.constant 0 : index
    %c0_4 = arith.constant 0 : index
    %2 = vector.load %arg3[%c0_3, %c0_4] : memref<1x128xbf16, #tpu.memory_space<vmem>>, vector<1x128xbf16>
    %cst = arith.constant dense<0.000000e+00> : vector<16x128xf32>
    %3 = tpu.matmul %0, %1, %cst {dimension_numbers = #tpu.dot_dimension_numbers<[1], [0], [0], [1], [0, 0, 1, 1], [], []>} : vector<16x128xbf16>, vector<128x128xbf16>, vector<16x128xf32> -> vector<16x128xf32>
    %4 = arith.extf %2 : vector<1x128xbf16> to vector<1x128xf32>
    %5 = vector.broadcast %4 : vector<1x128xf32> to vector<16x128xf32>
    %6 = arith.addf %3, %5 : vector<16x128xf32>
    %cst_5 = arith.constant 0.000000e+00 : f32
    %7 = vector.broadcast %cst_5 : f32 to vector<16x128xf32>
    %8 = arith.maximumf %6, %7 : vector<16x128xf32>
    %9 = arith.truncf %8 : vector<16x128xf32> to vector<16x128xbf16>
    %c0_6 = arith.constant 0 : index
    %c0_7 = arith.constant 0 : index
    %10 = vector.load %arg4[%c0_6, %c0_7] : memref<128x128xbf16, #tpu.memory_space<vmem>>, vector<128x128xbf16>
    %c0_8 = arith.constant 0 : index
    %c0_9 = arith.constant 0 : index
    %11 = vector.load %arg5[%c0_8, %c0_9] : memref<1x128xbf16, #tpu.memory_space<vmem>>, vector<1x128xbf16>
    %cst_10 = arith.constant dense<0.000000e+00> : vector<16x128xf32>
    %12 = tpu.matmul %9, %10, %cst_10 {dimension_numbers = #tpu.dot_dimension_numbers<[1], [0], [0], [1], [0, 0, 1, 1], [], []>} : vector<16x128xbf16>, vector<128x128xbf16>, vector<16x128xf32> -> vector<16x128xf32>
    %13 = arith.extf %11 : vector<1x128xbf16> to vector<1x128xf32>
    %14 = vector.broadcast %13 : vector<1x128xf32> to vector<16x128xf32>
    %15 = arith.addf %12, %14 : vector<16x128xf32>
    %cst_11 = arith.constant 0.000000e+00 : f32
    %16 = vector.broadcast %cst_11 : f32 to vector<16x128xf32>
    %17 = arith.maximumf %15, %16 : vector<16x128xf32>
    %18 = arith.truncf %17 : vector<16x128xf32> to vector<16x128xbf16>
    %c0_12 = arith.constant 0 : index
    %c0_13 = arith.constant 0 : index
    %19 = vector.load %arg6[%c0_12, %c0_13] : memref<128x128xbf16, #tpu.memory_space<vmem>>, vector<128x128xbf16>
    %c0_14 = arith.constant 0 : index
    %c0_15 = arith.constant 0 : index
    %20 = vector.load %arg7[%c0_14, %c0_15] : memref<1x128xbf16, #tpu.memory_space<vmem>>, vector<1x128xbf16>
    %cst_16 = arith.constant dense<0.000000e+00> : vector<16x128xf32>
    %21 = tpu.matmul %18, %19, %cst_16 {dimension_numbers = #tpu.dot_dimension_numbers<[1], [0], [0], [1], [0, 0, 1, 1], [], []>} : vector<16x128xbf16>, vector<128x128xbf16>, vector<16x128xf32> -> vector<16x128xf32>
    %22 = arith.extf %20 : vector<1x128xbf16> to vector<1x128xf32>
    %23 = vector.broadcast %22 : vector<1x128xf32> to vector<16x128xf32>
    %24 = arith.addf %21, %23 : vector<16x128xf32>
    %c0_17 = arith.constant 0 : index
    %c0_18 = arith.constant 0 : index
    %25 = vector.load %arg8[%c0_17, %c0_18] : memref<16x128xf32, #tpu.memory_space<vmem>>, vector<16x128xf32>
    tpu.vector_store %arg8[%c0_17, %c0_18], %24 {strides = array<i32>} : memref<16x128xf32, #tpu.memory_space<vmem>>, vector<16x128xf32>,
    return
  }
  func.func @transform_0(%arg0: i32) -> (i32, i32) {
    %c0_i32 = arith.constant 0 : i32
    %c0_i32_0 = arith.constant 0 : i32
    return %arg0, %c0_i32 : i32, i32
  }
  func.func @transform_1(%arg0: i32) -> (i32, i32) {
    %c0_i32 = arith.constant 0 : i32
    %c0_i32_0 = arith.constant 0 : i32
    %c0_i32_1 = arith.constant 0 : i32
    return %c0_i32, %c0_i32_0 : i32, i32
  }
  func.func @transform_2(%arg0: i32) -> (i32, i32) {
    %c0_i32 = arith.constant 0 : i32
    %c0_i32_0 = arith.constant 0 : i32
    %c0_i32_1 = arith.constant 0 : i32
    return %c0_i32, %c0_i32_0 : i32, i32
  }
  func.func @transform_3(%arg0: i32) -> (i32, i32) {
    %c0_i32 = arith.constant 0 : i32
    %c0_i32_0 = arith.constant 0 : i32
    %c0_i32_1 = arith.constant 0 : i32
    return %c0_i32, %c0_i32_0 : i32, i32
  }
  func.func @transform_4(%arg0: i32) -> (i32, i32) {
    %c0_i32 = arith.constant 0 : i32
    %c0_i32_0 = arith.constant 0 : i32
    %c0_i32_1 = arith.constant 0 : i32
    return %c0_i32, %c0_i32_0 : i32, i32
  }
  func.func @transform_5(%arg0: i32) -> (i32, i32) {
    %c0_i32 = arith.constant 0 : i32
    %c0_i32_0 = arith.constant 0 : i32
    %c0_i32_1 = arith.constant 0 : i32
    return %c0_i32, %c0_i32_0 : i32, i32
  }
  func.func @transform_6(%arg0: i32) -> (i32, i32) {
    %c0_i32 = arith.constant 0 : i32
    %c0_i32_0 = arith.constant 0 : i32
    %c0_i32_1 = arith.constant 0 : i32
    return %c0_i32, %c0_i32_0 : i32, i32
  }
  func.func @transform_7(%arg0: i32) -> (i32, i32) {
    %c0_i32 = arith.constant 0 : i32
    %c0_i32_0 = arith.constant 0 : i32
    return %arg0, %c0_i32 : i32, i32
  }
}

module attributes {stable_mosaic.version = 11 : i64} {
  func.func @_fused_mlp_kernel(%arg0: i32, %arg1: memref<16x128xbf16, #tpu.memory_space<vmem>>, %arg2: memref<128x128xbf16, #tpu.memory_space<vmem>>, %arg3: memref<1x128xbf16, #tpu.memory_space<vmem>>, %arg4: memref<128x128xbf16, #tpu.memory_space<vmem>>, %arg5: memref<1x128xbf16, #tpu.memory_space<vmem>>, %arg6: memref<128x128xbf16, #tpu.memory_space<vmem>>, %arg7: memref<1x128xbf16, #tpu.memory_space<vmem>>, %arg8: memref<16x128xf32, #tpu.memory_space<vmem>>) attributes {dimension_semantics = [#tpu.dimension_semantics<parallel>], iteration_bounds = array<i64: 1>, scalar_prefetch = 0 : i64, scratch_operands = 0 : i64, tpu.core_type = #tpu.core_type<tc>, window_params = [{transform_indices = @transform_0, window_bounds = array<i64: 16, 128>}, {pipeline_mode = #tpu.pipeline_mode<synchronous>, transform_indices = @transform_1, window_bounds = array<i64: 128, 128>}, {pipeline_mode = #tpu.pipeline_mode<synchronous>, transform_indices = @transform_2, window_bounds = array<i64: 1, 128>}, {pipeline_mode = #tpu.pipeline_mode<synchronous>, transform_indices = @transform_3, window_bounds = array<i64: 128, 128>}, {pipeline_mode = #tpu.pipeline_mode<synchronous>, transform_indices = @transform_4, window_bounds = array<i64: 1, 128>}, {pipeline_mode = #tpu.pipeline_mode<synchronous>, transform_indices = @transform_5, window_bounds = array<i64: 128, 128>}, {pipeline_mode = #tpu.pipeline_mode<synchronous>, transform_indices = @transform_6, window_bounds = array<i64: 1, 128>}, {transform_indices = @transform_7, window_bounds = array<i64: 16, 128>}]} {
    %c0 = arith.constant 0 : index
    %c0_0 = arith.constant 0 : index
    %0 = vector.load %arg1[%c0, %c0_0] : memref<16x128xbf16, #tpu.memory_space<vmem>>, vector<16x128xbf16>
    %c0_1 = arith.constant 0 : index
    %c0_2 = arith.constant 0 : index
    %1 = vector.load %arg2[%c0_1, %c0_2] : memref<128x128xbf16, #tpu.memory_space<vmem>>, vector<128x128xbf16>
    %c0_3 = arith.constant 0 : index
    %c0_4 = arith.constant 0 : index
    %2 = vector.load %arg3[%c0_3, %c0_4] : memref<1x128xbf16, #tpu.memory_space<vmem>>, vector<1x128xbf16>
    %cst = arith.constant dense<0.000000e+00> : vector<16x128xf32>
    %3 = tpu.matmul %0, %1, %cst {dimension_numbers = #tpu.dot_dimension_numbers<[1], [0], [0], [1], [0, 0, 1, 1], [], []>} : vector<16x128xbf16>, vector<128x128xbf16>, vector<16x128xf32> -> vector<16x128xf32>
    %4 = arith.extf %2 : vector<1x128xbf16> to vector<1x128xf32>
    %5 = vector.broadcast %4 : vector<1x128xf32> to vector<16x128xf32>
    %6 = arith.addf %3, %5 : vector<16x128xf32>
    %cst_5 = arith.constant 0.000000e+00 : f32
    %7 = vector.broadcast %cst_5 : f32 to vector<16x128xf32>
    %8 = arith.maximumf %6, %7 : vector<16x128xf32>
    %9 = arith.truncf %8 : vector<16x128xf32> to vector<16x128xbf16>
    %c0_6 = arith.constant 0 : index
    %c0_7 = arith.constant 0 : index
    %10 = vector.load %arg4[%c0_6, %c0_7] : memref<128x128xbf16, #tpu.memory_space<vmem>>, vector<128x128xbf16>
    %c0_8 = arith.constant 0 : index
    %c0_9 = arith.constant 0 : index
    %11 = vector.load %arg5[%c0_8, %c0_9] : memref<1x128xbf16, #tpu.memory_space<vmem>>, vector<1x128xbf16>
    %cst_10 = arith.constant dense<0.000000e+00> : vector<16x128xf32>
    %12 = tpu.matmul %9, %10, %cst_10 {dimension_numbers = #tpu.dot_dimension_numbers<[1], [0], [0], [1], [0, 0, 1, 1], [], []>} : vector<16x128xbf16>, vector<128x128xbf16>, vector<16x128xf32> -> vector<16x128xf32>
    %13 = arith.extf %11 : vector<1x128xbf16> to vector<1x128xf32>
    %14 = vector.broadcast %13 : vector<1x128xf32> to vector<16x128xf32>
    %15 = arith.addf %12, %14 : vector<16x128xf32>
    %cst_11 = arith.constant 0.000000e+00 : f32
    %16 = vector.broadcast %cst_11 : f32 to vector<16x128xf32>
    %17 = arith.maximumf %15, %16 : vector<16x128xf32>
    %18 = arith.truncf %17 : vector<16x128xf32> to vector<16x128xbf16>
    %c0_12 = arith.constant 0 : index
    %c0_13 = arith.constant 0 : index
    %19 = vector.load %arg6[%c0_12, %c0_13] : memref<128x128xbf16, #tpu.memory_space<vmem>>, vector<128x128xbf16>
    %c0_14 = arith.constant 0 : index
    %c0_15 = arith.constant 0 : index
    %20 = vector.load %arg7[%c0_14, %c0_15] : memref<1x128xbf16, #tpu.memory_space<vmem>>, vector<1x128xbf16>
    %cst_16 = arith.constant dense<0.000000e+00> : vector<16x128xf32>
    %21 = tpu.matmul %18, %19, %cst_16 {dimension_numbers = #tpu.dot_dimension_numbers<[1], [0], [0], [1], [0, 0, 1, 1], [], []>} : vector<16x128xbf16>, vector<128x128xbf16>, vector<16x128xf32> -> vector<16x128xf32>
    %22 = arith.extf %20 : vector<1x128xbf16> to vector<1x128xf32>
    %23 = vector.broadcast %22 : vector<1x128xf32> to vector<16x128xf32>
    %24 = arith.addf %21, %23 : vector<16x128xf32>
    %c0_17 = arith.constant 0 : index
    %c0_18 = arith.constant 0 : index
    %25 = vector.load %arg8[%c0_17, %c0_18] : memref<16x128xf32, #tpu.memory_space<vmem>>, vector<16x128xf32>
    tpu.vector_store %arg8[%c0_17, %c0_18], %24 {strides = array<i32>} : memref<16x128xf32, #tpu.memory_space<vmem>>, vector<16x128xf32>,
    return
  }
  func.func @transform_0(%arg0: i32) -> (i32, i32) {
    %c0_i32 = arith.constant 0 : i32
    %c0_i32_0 = arith.constant 0 : i32
    return %arg0, %c0_i32 : i32, i32
  }
  func.func @transform_1(%arg0: i32) -> (i32, i32) {
    %c0_i32 = arith.constant 0 : i32
    %c0_i32_0 = arith.constant 0 : i32
    %c0_i32_1 = arith.constant 0 : i32
    return %c0_i32, %c0_i32_0 : i32, i32
  }
  func.func @transform_2(%arg0: i32) -> (i32, i32) {
    %c0_i32 = arith.constant 0 : i32
    %c0_i32_0 = arith.constant 0 : i32
    %c0_i32_1 = arith.constant 0 : i32
    return %c0_i32, %c0_i32_0 : i32, i32
  }
  func.func @transform_3(%arg0: i32) -> (i32, i32) {
    %c0_i32 = arith.constant 0 : i32
    %c0_i32_0 = arith.constant 0 : i32
    %c0_i32_1 = arith.constant 0 : i32
    return %c0_i32, %c0_i32_0 : i32, i32
  }
  func.func @transform_4(%arg0: i32) -> (i32, i32) {
    %c0_i32 = arith.constant 0 : i32
    %c0_i32_0 = arith.constant 0 : i32
    %c0_i32_1 = arith.constant 0 : i32
    return %c0_i32, %c0_i32_0 : i32, i32
  }
  func.func @transform_5(%arg0: i32) -> (i32, i32) {
    %c0_i32 = arith.constant 0 : i32
    %c0_i32_0 = arith.constant 0 : i32
    %c0_i32_1 = arith.constant 0 : i32
    return %c0_i32, %c0_i32_0 : i32, i32
  }
  func.func @transform_6(%arg0: i32) -> (i32, i32) {
    %c0_i32 = arith.constant 0 : i32
    %c0_i32_0 = arith.constant 0 : i32
    %c0_i32_1 = arith.constant 0 : i32
    return %c0_i32, %c0_i32_0 : i32, i32
  }
  func.func @transform_7(%arg0: i32) -> (i32, i32) {
    %c0_i32 = arith.constant 0 : i32
    %c0_i32_0 = arith.constant 0 : i32
    return %arg0, %c0_i32 : i32, i32
  }
}

</mosaic_0001>

<llo_original>
// kernel: tpu_custom_call.1
$region0: #{tpu_custom_call.1}
  #allocation0 [shape = 'u32[]', space=smem, size = 0x4, offset = 0x4, fixed_abs, tag = 'smem constant byte address 0x4 - core index']
  #allocation1 [shape = 'u32[144,128]{1,0:T(1,128)}', space=vmem, size = 0x12000, scoped, tag = 'internal scratch']
  %s0 = inlined_call_operand.hbm [shape: bf16[16,128], index: 0, kind: input, shape index: {}]
  %s1 = inlined_call_operand.hbm [shape: bf16[128,128], index: 1, kind: input, shape index: {}]
  %s2 = inlined_call_operand.vmem [shape: bf16[1,128], index: 2, kind: input, shape index: {}]
  %s3 = inlined_call_operand.hbm [shape: bf16[128,128], index: 3, kind: input, shape index: {}]
  %s4 = inlined_call_operand.vmem [shape: bf16[1,128], index: 4, kind: input, shape index: {}]
  %s5 = inlined_call_operand.hbm [shape: bf16[128,128], index: 5, kind: input, shape index: {}]
  %s6 = inlined_call_operand.vmem [shape: bf16[1,128], index: 6, kind: input, shape index: {}]
  %s7 = inlined_call_operand.hbm [shape: f32[16,128], index: 7, kind: output, shape index: {}]
  %s8 = sld [smem:[#allocation0]]
  $region54: #{tpu_custom_call.1} parent=0
    _
  %s10 = ssub.s32 1, %s8
  %s11 = scalar_select 0, %s10, %s8
  $region1: #{tpu_custom_call.1} parent=0
    #allocation2 [shape = 'u8[4096]{0}', space=vmem, size = 0x1000, scoped, tag = 'input window, operand 0, single buffered']
    #allocation3 [shape = 's32[1]{0}', space=sflag, size = 0x4, scoped, tag = 'scoped memory for tpu_custom_call.1']
    #allocation4 [shape = 's32[1]{0}', space=sflag, size = 0x4, scoped, tag = 'scoped memory for tpu_custom_call.1']
    #allocation5 [shape = 'u8[32768]{0}', space=vmem, size = 0x8000, scoped, tag = 'input window, operand 1, single buffered']
    #allocation6 [shape = 's32[1]{0}', space=sflag, size = 0x4, scoped, tag = 'scoped memory for tpu_custom_call.1']
    #allocation7 [shape = 'u8[32768]{0}', space=vmem, size = 0x8000, scoped, tag = 'input window, operand 3, single buffered']
    #allocation8 [shape = 'u8[32768]{0}', space=vmem, size = 0x8000, scoped, tag = 'input window, operand 5, single buffered']
    #allocation9 [shape = 's32[1]{0}', space=sflag, size = 0x4, scoped, tag = 'scoped memory for tpu_custom_call.1']
    #allocation10 [shape = 'u8[8192]{0}', space=vmem, size = 0x2000, scoped, tag = 'output window, operand 0, single buffered']
    %12 = vsyncpa [#allocation3], 0
    %13 = vsyncpa [#allocation6], 0
    %14 = vsyncpa [#allocation9], 0
    %15 = vsyncpa [#allocation4], 0
    // Predicated region
    $region2: #{tpu_custom_call.1} parent=1 // pred_check
      _
    $region3: #{tpu_custom_call.1} parent=1 // pred_check_branch
      %17 = sbr.rel (0) target = $region5
    $region4: #{tpu_custom_call.1} parent=1 // pred_region
      %s19 = ssub.s32 128, 128
      %20 = vsyncadd [#allocation3], %s19
      %s21 = sshll.u32 [#allocation2], 4
      %s22 = int_to_ptr.vmem [resolvable:$true] %s21
      %27 = dma.hbm_to_vmem [thread:$0]  %s0, 128, %s22, [#allocation3], 64, 64, 4
    $region5: #{tpu_custom_call.1} parent=1 // pred_fallthru
      _
    // Predicated region
    $region6: #{tpu_custom_call.1} parent=1 // pred_check
      _
    $region7: #{tpu_custom_call.1} parent=1 // pred_check_branch
      %29 = sbr.rel (0) target = $region9
    $region8: #{tpu_custom_call.1} parent=1 // pred_region
      %s31 = ssub.s32 1024, 1024
      %32 = vsyncadd [#allocation6], %s31
      %s33 = sshll.u32 [#allocation5], 4
      %s34 = int_to_ptr.vmem [resolvable:$true] %s33
      %39 = dma.hbm_to_vmem [thread:$0]  %s1, 1024, %s34, [#allocation6], 64, 64, 4
    $region9: #{tpu_custom_call.1} parent=1 // pred_fallthru
      _
    // Predicated region
    $region10: #{tpu_custom_call.1} parent=1 // pred_check
      _
    $region11: #{tpu_custom_call.1} parent=1 // pred_check_branch
      %41 = sbr.rel (0) target = $region13
    $region12: #{tpu_custom_call.1} parent=1 // pred_region
      _
    $region13: #{tpu_custom_call.1} parent=1 // pred_fallthru
      _
    // Predicated region
    $region14: #{tpu_custom_call.1} parent=1 // pred_check
      _
    $region15: #{tpu_custom_call.1} parent=1 // pred_check_branch
      %43 = sbr.rel (0) target = $region17
    $region16: #{tpu_custom_call.1} parent=1 // pred_region
      %s45 = ssub.s32 1024, 1024
      %46 = vsyncadd [#allocation6], %s45
      %s47 = sshll.u32 [#allocation7], 4
      %s48 = int_to_ptr.vmem [resolvable:$true] %s47
      %53 = dma.hbm_to_vmem [thread:$0]  %s3, 1024, %s48, [#allocation6], 64, 64, 4
    $region17: #{tpu_custom_call.1} parent=1 // pred_fallthru
      _
    // Predicated region
    $region18: #{tpu_custom_call.1} parent=1 // pred_check
      _
    $region19: #{tpu_custom_call.1} parent=1 // pred_check_branch
      %55 = sbr.rel (0) target = $region21
    $region20: #{tpu_custom_call.1} parent=1 // pred_region
      _
    $region21: #{tpu_custom_call.1} parent=1 // pred_fallthru
      _
    // Predicated region
    $region22: #{tpu_custom_call.1} parent=1 // pred_check
      _
    $region23: #{tpu_custom_call.1} parent=1 // pred_check_branch
      %57 = sbr.rel (0) target = $region25
    $region24: #{tpu_custom_call.1} parent=1 // pred_region
      %s59 = ssub.s32 1024, 1024
      %60 = vsyncadd [#allocation9], %s59
      %s61 = sshll.u32 [#allocation8], 4
      %s62 = int_to_ptr.vmem [resolvable:$true] %s61
      %67 = dma.hbm_to_vmem [thread:$0]  %s5, 1024, %s62, [#allocation9], 64, 64, 4
    $region25: #{tpu_custom_call.1} parent=1 // pred_fallthru
      _
    // Predicated region
    $region26: #{tpu_custom_call.1} parent=1 // pred_check
      _
    $region27: #{tpu_custom_call.1} parent=1 // pred_check_branch
      %69 = sbr.rel (0) target = $region29
    $region28: #{tpu_custom_call.1} parent=1 // pred_region
      _
    $region29: #{tpu_custom_call.1} parent=1 // pred_fallthru
      _
    // Predicated region
    $region30: #{tpu_custom_call.1} parent=1 // pred_check
      _
    $region31: #{tpu_custom_call.1} parent=1 // pred_check_branch
      %71 = sbr.rel (0) target = $region33
    $region32: #{tpu_custom_call.1} parent=1 // pred_region
      %72 = dma.done [#allocation3], 128
    $region33: #{tpu_custom_call.1} parent=1 // pred_fallthru
      _
    // Predicated region
    $region34: #{tpu_custom_call.1} parent=1 // pred_check
      _
    $region35: #{tpu_custom_call.1} parent=1 // pred_check_branch
      %74 = sbr.rel (0) target = $region37
    $region36: #{tpu_custom_call.1} parent=1 // pred_region
      %75 = dma.done [#allocation6], 1024
    $region37: #{tpu_custom_call.1} parent=1 // pred_fallthru
      _
    // Predicated region
    $region38: #{tpu_custom_call.1} parent=1 // pred_check
      _
    $region39: #{tpu_custom_call.1} parent=1 // pred_check_branch
      %77 = sbr.rel (0) target = $region41
    $region40: #{tpu_custom_call.1} parent=1 // pred_region
      %78 = dma.done [#allocation6], 1024
    $region41: #{tpu_custom_call.1} parent=1 // pred_fallthru
      _
    // Predicated region
    $region42: #{tpu_custom_call.1} parent=1 // pred_check
      _
    $region43: #{tpu_custom_call.1} parent=1 // pred_check_branch
      %80 = sbr.rel (0) target = $region45
    $region44: #{tpu_custom_call.1} parent=1 // pred_region
      %81 = dma.done [#allocation9], 1024
    $region45: #{tpu_custom_call.1} parent=1 // pred_fallthru
      _
    %v83 = vld [vmem:[#allocation2] sm:$0xf]
    %v84 = vld [vmem:[#allocation2 + $0x4] sm:$0xf]
    %v85 = vld [vmem:[#allocation5] sm:$0xf]
    %v86 = vld [vmem:[#allocation5 + $0x4] sm:$0xf]
    %v87 = vld [vmem:[#allocation5 + $0x8] sm:$0xf]
    %v88 = vld [vmem:[#allocation5 + $0xc] sm:$0xf]
    %v89 = vld [vmem:[#allocation5 + $0x10] sm:$0xf]
    %v90 = vld [vmem:[#allocation5 + $0x14] sm:$0xf]
    %v91 = vld [vmem:[#allocation5 + $0x18] sm:$0xf]
    %v92 = vld [vmem:[#allocation5 + $0x1c] sm:$0xf]
    %v93 = vld [vmem:[#allocation5 + $0x20] sm:$0xf]
    %v94 = vld [vmem:[#allocation5 + $0x24] sm:$0xf]
    %v95 = vld [vmem:[#allocation5 + $0x28] sm:$0xf]
    %v96 = vld [vmem:[#allocation5 + $0x2c] sm:$0xf]
    %v97 = vld [vmem:[#allocation5 + $0x30] sm:$0xf]
    %v98 = vld [vmem:[#allocation5 + $0x34] sm:$0xf]
    %v99 = vld [vmem:[#allocation5 + $0x38] sm:$0xf]
    %v100 = vld [vmem:[#allocation5 + $0x3c] sm:$0xf]
    %v101 = vld [vmem:[%s2] sm:$0x1]
    %v102 = vunpack.c.l.bf16 %v101
    %v103 = vlaneseq
    %v104 = vshrl.u32 %v103, 7
    %v105 = vsub.s32 0, %v104
    %v106 = vrot.slane %v102, %v105
    %v109 = vunpack.c.l.b16 %v83
    %v110 = vunpack.c.l.b16 %v84
    %v111 = vpack.c.b16 %v110, %v109
    %v129 = vunpack.c.l.b16 %v85
    %v130 = vunpack.c.l.b16 %v86
    %v131 = vunpack.c.l.b16 %v87
    %v132 = vunpack.c.l.b16 %v88
    %v133 = vunpack.c.l.b16 %v89
    %v134 = vunpack.c.l.b16 %v90
    %v135 = vunpack.c.l.b16 %v91
    %v136 = vunpack.c.l.b16 %v92
    %v137 = vunpack.c.l.b16 %v93
    %v138 = vunpack.c.l.b16 %v94
    %v139 = vunpack.c.l.b16 %v95
    %v140 = vunpack.c.l.b16 %v96
    %v141 = vunpack.c.l.b16 %v97
    %v142 = vunpack.c.l.b16 %v98
    %v143 = vunpack.c.l.b16 %v99
    %v144 = vunpack.c.l.b16 %v100
    %v145 = vpack.c.b16 %v130, %v129
    %v146 = vpack.c.b16 %v132, %v131
    %v147 = vpack.c.b16 %v134, %v133
    %v148 = vpack.c.b16 %v136, %v135
    %v149 = vpack.c.b16 %v138, %v137
    %v150 = vpack.c.b16 %v140, %v139
    %v151 = vpack.c.b16 %v142, %v141
    %v152 = vpack.c.b16 %v144, %v143
    %161 = vmatprep.subr.bf16.mxu0 0
    %162 = vmatpush1.bf16.msra.mxu0 %v145
    %163 = vmatprep.subr.bf16.mxu0 0
    %164 = vmatpush1.bf16.msra.mxu0 %v146
    %165 = vmatprep.subr.bf16.mxu0 0
    %166 = vmatpush1.bf16.msra.mxu0 %v147
    %167 = vmatprep.subr.bf16.mxu0 0
    %168 = vmatpush1.bf16.msra.mxu0 %v148
    %169 = vmatprep.subr.bf16.mxu0 0
    %170 = vmatpush1.bf16.msra.mxu0 %v149
    %171 = vmatprep.subr.bf16.mxu0 0
    %172 = vmatpush1.bf16.msra.mxu0 %v150
    %173 = vmatprep.subr.bf16.mxu0 0
    %174 = vmatpush1.bf16.msra.mxu0 %v151
    %175 = vmatprep.subr.bf16.mxu0 0
    %176 = vmatpush1.bf16.msra.mxu0 %v152
    %177 = vmatprep.subr.bf16.mxu0 0
    %178 = vmatpush1.bf16.msra.mxu0 0
    %179 = vmatprep.subr.bf16.mxu0 0
    %180 = vmatpush1.bf16.msra.mxu0 0
    %181 = vmatprep.subr.bf16.mxu0 0
    %182 = vmatpush1.bf16.msra.mxu0 0
    %183 = vmatprep.subr.bf16.mxu0 0
    %184 = vmatpush1.bf16.msra.mxu0 0
    %185 = vmatprep.subr.bf16.mxu0 0
    %186 = vmatpush1.bf16.msra.mxu0 0
    %187 = vmatprep.subr.bf16.mxu0 0
    %188 = vmatpush1.bf16.msra.mxu0 0
    %189 = vmatprep.subr.bf16.mxu0 0
    %190 = vmatpush1.bf16.msra.mxu0 0
    %191 = vmatprep.subr.bf16.mxu0 0
    %192 = vmatpush1.bf16.msra.mxu0 0
    %193 = vmatprep.mubr.bf16.mxu0 0
    %194 = vmatmul.mubr.bf16.gmra.mrb[0].mxu0 %v111
    %v195 = vpop.f32.mrb[0].mxu0
    %v196 = vadd.f32 %v106, %v195
    %v197 = vpop.f32.mrb[0].mxu0
    %v198 = vpop.f32.mrb[0].mxu0
    %v199 = vadd.f32 %v106, %v198
    %v200 = vpop.f32.mrb[0].mxu0
    %201 = vdwg.mxu0
    %v202 = vmax.f32 %v196, 0.0
    %v203 = vmax.f32 %v199, 0.0
    %v204 = vpack.c.bf16 %v203, %v202
    %v205 = vld [vmem:[#allocation7] sm:$0xf]
    %v206 = vld [vmem:[#allocation7 + $0x4] sm:$0xf]
    %v207 = vld [vmem:[#allocation7 + $0x8] sm:$0xf]
    %v208 = vld [vmem:[#allocation7 + $0xc] sm:$0xf]
    %v209 = vld [vmem:[#allocation7 + $0x10] sm:$0xf]
    %v210 = vld [vmem:[#allocation7 + $0x14] sm:$0xf]
    %v211 = vld [vmem:[#allocation7 + $0x18] sm:$0xf]
    %v212 = vld [vmem:[#allocation7 + $0x1c] sm:$0xf]
    %v213 = vld [vmem:[#allocation7 + $0x20] sm:$0xf]
    %v214 = vld [vmem:[#allocation7 + $0x24] sm:$0xf]
    %v215 = vld [vmem:[#allocation7 + $0x28] sm:$0xf]
    %v216 = vld [vmem:[#allocation7 + $0x2c] sm:$0xf]
    %v217 = vld [vmem:[#allocation7 + $0x30] sm:$0xf]
    %v218 = vld [vmem:[#allocation7 + $0x34] sm:$0xf]
    %v219 = vld [vmem:[#allocation7 + $0x38] sm:$0xf]
    %v220 = vld [vmem:[#allocation7 + $0x3c] sm:$0xf]
    %v221 = vld [vmem:[%s4] sm:$0x1]
    %v222 = vunpack.c.l.bf16 %v221
    %v223 = vlaneseq
    %v224 = vshrl.u32 %v223, 7
    %v225 = vsub.s32 0, %v224
    %v226 = vrot.slane %v222, %v225
    %v243 = vunpack.c.l.b16 %v205
    %v244 = vunpack.c.l.b16 %v206
    %v245 = vunpack.c.l.b16 %v207
    %v246 = vunpack.c.l.b16 %v208
    %v247 = vunpack.c.l.b16 %v209
    %v248 = vunpack.c.l.b16 %v210
    %v249 = vunpack.c.l.b16 %v211
    %v250 = vunpack.c.l.b16 %v212
    %v251 = vunpack.c.l.b16 %v213
    %v252 = vunpack.c.l.b16 %v214
    %v253 = vunpack.c.l.b16 %v215
    %v254 = vunpack.c.l.b16 %v216
    %v255 = vunpack.c.l.b16 %v217
    %v256 = vunpack.c.l.b16 %v218
    %v257 = vunpack.c.l.b16 %v219
    %v258 = vunpack.c.l.b16 %v220
    %v259 = vpack.c.b16 %v244, %v243
    %v260 = vpack.c.b16 %v246, %v245
    %v261 = vpack.c.b16 %v248, %v247
    %v262 = vpack.c.b16 %v250, %v249
    %v263 = vpack.c.b16 %v252, %v251
    %v264 = vpack.c.b16 %v254, %v253
    %v265 = vpack.c.b16 %v256, %v255
    %v266 = vpack.c.b16 %v258, %v257
    %275 = vmatprep.subr.bf16.mxu0 0
    %276 = vmatpush1.bf16.msra.mxu0 %v259
    %277 = vmatprep.subr.bf16.mxu0 0
    %278 = vmatpush1.bf16.msra.mxu0 %v260
    %279 = vmatprep.subr.bf16.mxu0 0
    %280 = vmatpush1.bf16.msra.mxu0 %v261
    %281 = vmatprep.subr.bf16.mxu0 0
    %282 = vmatpush1.bf16.msra.mxu0 %v262
    %283 = vmatprep.subr.bf16.mxu0 0
    %284 = vmatpush1.bf16.msra.mxu0 %v263
    %285 = vmatprep.subr.bf16.mxu0 0
    %286 = vmatpush1.bf16.msra.mxu0 %v264
    %287 = vmatprep.subr.bf16.mxu0 0
    %288 = vmatpush1.bf16.msra.mxu0 %v265
    %289 = vmatprep.subr.bf16.mxu0 0
    %290 = vmatpush1.bf16.msra.mxu0 %v266
    %291 = vmatprep.subr.bf16.mxu0 0
    %292 = vmatpush1.bf16.msra.mxu0 0
    %293 = vmatprep.subr.bf16.mxu0 0
    %294 = vmatpush1.bf16.msra.mxu0 0
    %295 = vmatprep.subr.bf16.mxu0 0
    %296 = vmatpush1.bf16.msra.mxu0 0
    %297 = vmatprep.subr.bf16.mxu0 0
    %298 = vmatpush1.bf16.msra.mxu0 0
    %299 = vmatprep.subr.bf16.mxu0 0
    %300 = vmatpush1.bf16.msra.mxu0 0
    %301 = vmatprep.subr.bf16.mxu0 0
    %302 = vmatpush1.bf16.msra.mxu0 0
    %303 = vmatprep.subr.bf16.mxu0 0
    %304 = vmatpush1.bf16.msra.mxu0 0
    %305 = vmatprep.subr.bf16.mxu0 0
    %306 = vmatpush1.bf16.msra.mxu0 0
    %307 = vmatprep.mubr.bf16.mxu0 0
    %308 = vmatmul.mubr.bf16.gmra.mrb[0].mxu0 %v204
    %v309 = vpop.f32.mrb[0].mxu0
    %v310 = vadd.f32 %v226, %v309
    %v311 = vpop.f32.mrb[0].mxu0
    %v312 = vpop.f32.mrb[0].mxu0
    %v313 = vadd.f32 %v226, %v312
    %v314 = vpop.f32.mrb[0].mxu0
    %315 = vdwg.mxu0
    %v316 = vmax.f32 %v310, 0.0
    %v317 = vmax.f32 %v313, 0.0
    %v318 = vpack.c.bf16 %v317, %v316
    %v319 = vld [vmem:[#allocation8] sm:$0xf]
    %v320 = vld [vmem:[#allocation8 + $0x4] sm:$0xf]
    %v321 = vld [vmem:[#allocation8 + $0x8] sm:$0xf]
    %v322 = vld [vmem:[#allocation8 + $0xc] sm:$0xf]
    %v323 = vld [vmem:[#allocation8 + $0x10] sm:$0xf]
    %v324 = vld [vmem:[#allocation8 + $0x14] sm:$0xf]
    %v325 = vld [vmem:[#allocation8 + $0x18] sm:$0xf]
    %v326 = vld [vmem:[#allocation8 + $0x1c] sm:$0xf]
    %v327 = vld [vmem:[#allocation8 + $0x20] sm:$0xf]
    %v328 = vld [vmem:[#allocation8 + $0x24] sm:$0xf]
    %v329 = vld [vmem:[#allocation8 + $0x28] sm:$0xf]
    %v330 = vld [vmem:[#allocation8 + $0x2c] sm:$0xf]
    %v331 = vld [vmem:[#allocation8 + $0x30] sm:$0xf]
    %v332 = vld [vmem:[#allocation8 + $0x34] sm:$0xf]
    %v333 = vld [vmem:[#allocation8 + $0x38] sm:$0xf]
    %v334 = vld [vmem:[#allocation8 + $0x3c] sm:$0xf]
    %v335 = vld [vmem:[%s6] sm:$0x1]
    %v336 = vunpack.c.l.bf16 %v335
    %v337 = vlaneseq
    %v338 = vshrl.u32 %v337, 7
    %v339 = vsub.s32 0, %v338
    %v340 = vrot.slane %v336, %v339
    %v357 = vunpack.c.l.b16 %v319
    %v358 = vunpack.c.l.b16 %v320
    %v359 = vunpack.c.l.b16 %v321
    %v360 = vunpack.c.l.b16 %v322
    %v361 = vunpack.c.l.b16 %v323
    %v362 = vunpack.c.l.b16 %v324
    %v363 = vunpack.c.l.b16 %v325
    %v364 = vunpack.c.l.b16 %v326
    %v365 = vunpack.c.l.b16 %v327
    %v366 = vunpack.c.l.b16 %v328
    %v367 = vunpack.c.l.b16 %v329
    %v368 = vunpack.c.l.b16 %v330
    %v369 = vunpack.c.l.b16 %v331
    %v370 = vunpack.c.l.b16 %v332
    %v371 = vunpack.c.l.b16 %v333
    %v372 = vunpack.c.l.b16 %v334
    %v373 = vpack.c.b16 %v358, %v357
    %v374 = vpack.c.b16 %v360, %v359
    %v375 = vpack.c.b16 %v362, %v361
    %v376 = vpack.c.b16 %v364, %v363
    %v377 = vpack.c.b16 %v366, %v365
    %v378 = vpack.c.b16 %v368, %v367
    %v379 = vpack.c.b16 %v370, %v369
    %v380 = vpack.c.b16 %v372, %v371
    %389 = vmatprep.subr.bf16.mxu0 0
    %390 = vmatpush1.bf16.msra.mxu0 %v373
    %391 = vmatprep.subr.bf16.mxu0 0
    %392 = vmatpush1.bf16.msra.mxu0 %v374
    %393 = vmatprep.subr.bf16.mxu0 0
    %394 = vmatpush1.bf16.msra.mxu0 %v375
    %395 = vmatprep.subr.bf16.mxu0 0
    %396 = vmatpush1.bf16.msra.mxu0 %v376
    %397 = vmatprep.subr.bf16.mxu0 0
    %398 = vmatpush1.bf16.msra.mxu0 %v377
    %399 = vmatprep.subr.bf16.mxu0 0
    %400 = vmatpush1.bf16.msra.mxu0 %v378
    %401 = vmatprep.subr.bf16.mxu0 0
    %402 = vmatpush1.bf16.msra.mxu0 %v379
    %403 = vmatprep.subr.bf16.mxu0 0
    %404 = vmatpush1.bf16.msra.mxu0 %v380
    %405 = vmatprep.subr.bf16.mxu0 0
    %406 = vmatpush1.bf16.msra.mxu0 0
    %407 = vmatprep.subr.bf16.mxu0 0
    %408 = vmatpush1.bf16.msra.mxu0 0
    %409 = vmatprep.subr.bf16.mxu0 0
    %410 = vmatpush1.bf16.msra.mxu0 0
    %411 = vmatprep.subr.bf16.mxu0 0
    %412 = vmatpush1.bf16.msra.mxu0 0
    %413 = vmatprep.subr.bf16.mxu0 0
    %414 = vmatpush1.bf16.msra.mxu0 0
    %415 = vmatprep.subr.bf16.mxu0 0
    %416 = vmatpush1.bf16.msra.mxu0 0
    %417 = vmatprep.subr.bf16.mxu0 0
    %418 = vmatpush1.bf16.msra.mxu0 0
    %419 = vmatprep.subr.bf16.mxu0 0
    %420 = vmatpush1.bf16.msra.mxu0 0
    %421 = vmatprep.mubr.bf16.mxu0 0
    %422 = vmatmul.mubr.bf16.gmra.mrb[0].mxu0 %v318
    %v423 = vpop.f32.mrb[0].mxu0
    %v424 = vadd.f32 %v340, %v423
    %v425 = vpop.f32.mrb[0].mxu0
    %v426 = vpop.f32.mrb[0].mxu0
    %v427 = vadd.f32 %v340, %v426
    %v428 = vpop.f32.mrb[0].mxu0
    %429 = vdwg.mxu0
    %430 = vst [vmem:[#allocation10] sm:$0xff] %v424
    %431 = vst [vmem:[#allocation10 + $0x8] sm:$0xff] %v427
    // Predicated region
    $region46: #{tpu_custom_call.1} parent=1 // pred_check
      _
    $region47: #{tpu_custom_call.1} parent=1 // pred_check_branch
      %433 = sbr.rel (0) target = $region49
    $region48: #{tpu_custom_call.1} parent=1 // pred_region
      %s435 = ssub.s32 256, 256
      %436 = vsyncadd [#allocation4], %s435
      %s437 = sshll.u32 [#allocation10], 4
      %s438 = int_to_ptr.vmem [resolvable:$true] %s437
      %443 = dma.vmem_to_hbm [thread:$0]  %s438, 256, %s7, [#allocation4], 128, 128, 8
    $region49: #{tpu_custom_call.1} parent=1 // pred_fallthru
      _
    // Predicated region
    $region50: #{tpu_custom_call.1} parent=1 // pred_check
      _
    $region51: #{tpu_custom_call.1} parent=1 // pred_check_branch
      %445 = sbr.rel (0) target = $region53
    $region52: #{tpu_custom_call.1} parent=1 // pred_region
      %446 = dma.done [#allocation4], 256
    $region53: #{tpu_custom_call.1} parent=1 // pred_fallthru
      _
    %447 = vsyncpa [#allocation3], 1
    %448 = vsyncpa [#allocation6], 1
    %449 = vsyncpa [#allocation9], 1
    %450 = vsyncpa [#allocation4], 1

// kernel: tpu_custom_call.1
$region0: #{tpu_custom_call.1}
  #allocation0 [shape = 'u32[]', space=smem, size = 0x4, offset = 0x4, fixed_abs, tag = 'smem constant byte address 0x4 - core index']
  #allocation1 [shape = 'u32[144,128]{1,0:T(1,128)}', space=vmem, size = 0x12000, scoped, tag = 'internal scratch']
  %s0 = inlined_call_operand.hbm [shape: bf16[16,128], index: 0, kind: input, shape index: {}]
  %s1 = inlined_call_operand.hbm [shape: bf16[128,128], index: 1, kind: input, shape index: {}]
  %s2 = inlined_call_operand.vmem [shape: bf16[1,128], index: 2, kind: input, shape index: {}]
  %s3 = inlined_call_operand.hbm [shape: bf16[128,128], index: 3, kind: input, shape index: {}]
  %s4 = inlined_call_operand.vmem [shape: bf16[1,128], index: 4, kind: input, shape index: {}]
  %s5 = inlined_call_operand.hbm [shape: bf16[128,128], index: 5, kind: input, shape index: {}]
  %s6 = inlined_call_operand.vmem [shape: bf16[1,128], index: 6, kind: input, shape index: {}]
  %s7 = inlined_call_operand.hbm [shape: f32[16,128], index: 7, kind: output, shape index: {}]
  %s8 = sld [smem:[#allocation0]]
  $region54: #{tpu_custom_call.1} parent=0
    _
  %s10 = ssub.s32 1, %s8
  %s11 = scalar_select 0, %s10, %s8
  $region1: #{tpu_custom_call.1} parent=0
    #allocation2 [shape = 'u8[4096]{0}', space=vmem, size = 0x1000, scoped, tag = 'input window, operand 0, single buffered']
    #allocation3 [shape = 's32[1]{0}', space=sflag, size = 0x4, scoped, tag = 'scoped memory for tpu_custom_call.1']
    #allocation4 [shape = 's32[1]{0}', space=sflag, size = 0x4, scoped, tag = 'scoped memory for tpu_custom_call.1']
    #allocation5 [shape = 'u8[32768]{0}', space=vmem, size = 0x8000, scoped, tag = 'input window, operand 1, single buffered']
    #allocation6 [shape = 's32[1]{0}', space=sflag, size = 0x4, scoped, tag = 'scoped memory for tpu_custom_call.1']
    #allocation7 [shape = 'u8[32768]{0}', space=vmem, size = 0x8000, scoped, tag = 'input window, operand 3, single buffered']
    #allocation8 [shape = 'u8[32768]{0}', space=vmem, size = 0x8000, scoped, tag = 'input window, operand 5, single buffered']
    #allocation9 [shape = 's32[1]{0}', space=sflag, size = 0x4, scoped, tag = 'scoped memory for tpu_custom_call.1']
    #allocation10 [shape = 'u8[8192]{0}', space=vmem, size = 0x2000, scoped, tag = 'output window, operand 0, single buffered']
    %12 = vsyncpa [#allocation3], 0
    %13 = vsyncpa [#allocation6], 0
    %14 = vsyncpa [#allocation9], 0
    %15 = vsyncpa [#allocation4], 0
    // Predicated region
    $region2: #{tpu_custom_call.1} parent=1 // pred_check
      _
    $region3: #{tpu_custom_call.1} parent=1 // pred_check_branch
      %17 = sbr.rel (0) target = $region5
    $region4: #{tpu_custom_call.1} parent=1 // pred_region
      %s19 = ssub.s32 128, 128
      %20 = vsyncadd [#allocation3], %s19
      %s21 = sshll.u32 [#allocation2], 4
      %s22 = int_to_ptr.vmem [resolvable:$true] %s21
      %27 = dma.hbm_to_vmem [thread:$0]  %s0, 128, %s22, [#allocation3], 64, 64, 4
    $region5: #{tpu_custom_call.1} parent=1 // pred_fallthru
      _
    // Predicated region
    $region6: #{tpu_custom_call.1} parent=1 // pred_check
      _
    $region7: #{tpu_custom_call.1} parent=1 // pred_check_branch
      %29 = sbr.rel (0) target = $region9
    $region8: #{tpu_custom_call.1} parent=1 // pred_region
      %s31 = ssub.s32 1024, 1024
      %32 = vsyncadd [#allocation6], %s31
      %s33 = sshll.u32 [#allocation5], 4
      %s34 = int_to_ptr.vmem [resolvable:$true] %s33
      %39 = dma.hbm_to_vmem [thread:$0]  %s1, 1024, %s34, [#allocation6], 64, 64, 4
    $region9: #{tpu_custom_call.1} parent=1 // pred_fallthru
      _
    // Predicated region
    $region10: #{tpu_custom_call.1} parent=1 // pred_check
      _
    $region11: #{tpu_custom_call.1} parent=1 // pred_check_branch
      %41 = sbr.rel (0) target = $region13
    $region12: #{tpu_custom_call.1} parent=1 // pred_region
      _
    $region13: #{tpu_custom_call.1} parent=1 // pred_fallthru
      _
    // Predicated region
    $region14: #{tpu_custom_call.1} parent=1 // pred_check
      _
    $region15: #{tpu_custom_call.1} parent=1 // pred_check_branch
      %43 = sbr.rel (0) target = $region17
    $region16: #{tpu_custom_call.1} parent=1 // pred_region
      %s45 = ssub.s32 1024, 1024
      %46 = vsyncadd [#allocation6], %s45
      %s47 = sshll.u32 [#allocation7], 4
      %s48 = int_to_ptr.vmem [resolvable:$true] %s47
      %53 = dma.hbm_to_vmem [thread:$0]  %s3, 1024, %s48, [#allocation6], 64, 64, 4
    $region17: #{tpu_custom_call.1} parent=1 // pred_fallthru
      _
    // Predicated region
    $region18: #{tpu_custom_call.1} parent=1 // pred_check
      _
    $region19: #{tpu_custom_call.1} parent=1 // pred_check_branch
      %55 = sbr.rel (0) target = $region21
    $region20: #{tpu_custom_call.1} parent=1 // pred_region
      _
    $region21: #{tpu_custom_call.1} parent=1 // pred_fallthru
      _
    // Predicated region
    $region22: #{tpu_custom_call.1} parent=1 // pred_check
      _
    $region23: #{tpu_custom_call.1} parent=1 // pred_check_branch
      %57 = sbr.rel (0) target = $region25
    $region24: #{tpu_custom_call.1} parent=1 // pred_region
      %s59 = ssub.s32 1024, 1024
      %60 = vsyncadd [#allocation9], %s59
      %s61 = sshll.u32 [#allocation8], 4
      %s62 = int_to_ptr.vmem [resolvable:$true] %s61
      %67 = dma.hbm_to_vmem [thread:$0]  %s5, 1024, %s62, [#allocation9], 64, 64, 4
    $region25: #{tpu_custom_call.1} parent=1 // pred_fallthru
      _
    // Predicated region
    $region26: #{tpu_custom_call.1} parent=1 // pred_check
      _
    $region27: #{tpu_custom_call.1} parent=1 // pred_check_branch
      %69 = sbr.rel (0) target = $region29
    $region28: #{tpu_custom_call.1} parent=1 // pred_region
      _
    $region29: #{tpu_custom_call.1} parent=1 // pred_fallthru
      _
    // Predicated region
    $region30: #{tpu_custom_call.1} parent=1 // pred_check
      _
    $region31: #{tpu_custom_call.1} parent=1 // pred_check_branch
      %71 = sbr.rel (0) target = $region33
    $region32: #{tpu_custom_call.1} parent=1 // pred_region
      %72 = dma.done [#allocation3], 128
    $region33: #{tpu_custom_call.1} parent=1 // pred_fallthru
      _
    // Predicated region
    $region34: #{tpu_custom_call.1} parent=1 // pred_check
      _
    $region35: #{tpu_custom_call.1} parent=1 // pred_check_branch
      %74 = sbr.rel (0) target = $region37
    $region36: #{tpu_custom_call.1} parent=1 // pred_region
      %75 = dma.done [#allocation6], 1024
    $region37: #{tpu_custom_call.1} parent=1 // pred_fallthru
      _
    // Predicated region
    $region38: #{tpu_custom_call.1} parent=1 // pred_check
      _
    $region39: #{tpu_custom_call.1} parent=1 // pred_check_branch
      %77 = sbr.rel (0) target = $region41
    $region40: #{tpu_custom_call.1} parent=1 // pred_region
      %78 = dma.done [#allocation6], 1024
    $region41: #{tpu_custom_call.1} parent=1 // pred_fallthru
      _
    // Predicated region
    $region42: #{tpu_custom_call.1} parent=1 // pred_check
      _
    $region43: #{tpu_custom_call.1} parent=1 // pred_check_branch
      %80 = sbr.rel (0) target = $region45
    $region44: #{tpu_custom_call.1} parent=1 // pred_region
      %81 = dma.done [#allocation9], 1024
    $region45: #{tpu_custom_call.1} parent=1 // pred_fallthru
      _
    %v83 = vld [vmem:[#allocation2] sm:$0xf]
    %v84 = vld [vmem:[#allocation2 + $0x4] sm:$0xf]
    %v85 = vld [vmem:[#allocation5] sm:$0xf]
    %v86 = vld [vmem:[#allocation5 + $0x4] sm:$0xf]
    %v87 = vld [vmem:[#allocation5 + $0x8] sm:$0xf]
    %v88 = vld [vmem:[#allocation5 + $0xc] sm:$0xf]
    %v89 = vld [vmem:[#allocation5 + $0x10] sm:$0xf]
    %v90 = vld [vmem:[#allocation5 + $0x14] sm:$0xf]
    %v91 = vld [vmem:[#allocation5 + $0x18] sm:$0xf]
    %v92 = vld [vmem:[#allocation5 + $0x1c] sm:$0xf]
    %v93 = vld [vmem:[#allocation5 + $0x20] sm:$0xf]
    %v94 = vld [vmem:[#allocation5 + $0x24] sm:$0xf]
    %v95 = vld [vmem:[#allocation5 + $0x28] sm:$0xf]
    %v96 = vld [vmem:[#allocation5 + $0x2c] sm:$0xf]
    %v97 = vld [vmem:[#allocation5 + $0x30] sm:$0xf]
    %v98 = vld [vmem:[#allocation5 + $0x34] sm:$0xf]
    %v99 = vld [vmem:[#allocation5 + $0x38] sm:$0xf]
    %v100 = vld [vmem:[#allocation5 + $0x3c] sm:$0xf]
    %v101 = vld [vmem:[%s2] sm:$0x1]
    %v102 = vunpack.c.l.bf16 %v101
    %v103 = vlaneseq
    %v104 = vshrl.u32 %v103, 7
    %v105 = vsub.s32 0, %v104
    %v106 = vrot.slane %v102, %v105
    %v109 = vunpack.c.l.b16 %v83
    %v110 = vunpack.c.l.b16 %v84
    %v111 = vpack.c.b16 %v110, %v109
    %v129 = vunpack.c.l.b16 %v85
    %v130 = vunpack.c.l.b16 %v86
    %v131 = vunpack.c.l.b16 %v87
    %v132 = vunpack.c.l.b16 %v88
    %v133 = vunpack.c.l.b16 %v89
    %v134 = vunpack.c.l.b16 %v90
    %v135 = vunpack.c.l.b16 %v91
    %v136 = vunpack.c.l.b16 %v92
    %v137 = vunpack.c.l.b16 %v93
    %v138 = vunpack.c.l.b16 %v94
    %v139 = vunpack.c.l.b16 %v95
    %v140 = vunpack.c.l.b16 %v96
    %v141 = vunpack.c.l.b16 %v97
    %v142 = vunpack.c.l.b16 %v98
    %v143 = vunpack.c.l.b16 %v99
    %v144 = vunpack.c.l.b16 %v100
    %v145 = vpack.c.b16 %v130, %v129
    %v146 = vpack.c.b16 %v132, %v131
    %v147 = vpack.c.b16 %v134, %v133
    %v148 = vpack.c.b16 %v136, %v135
    %v149 = vpack.c.b16 %v138, %v137
    %v150 = vpack.c.b16 %v140, %v139
    %v151 = vpack.c.b16 %v142, %v141
    %v152 = vpack.c.b16 %v144, %v143
    %161 = vmatprep.subr.bf16.mxu0 0
    %162 = vmatpush1.bf16.msra.mxu0 %v145
    %163 = vmatprep.subr.bf16.mxu0 0
    %164 = vmatpush1.bf16.msra.mxu0 %v146
    %165 = vmatprep.subr.bf16.mxu0 0
    %166 = vmatpush1.bf16.msra.mxu0 %v147
    %167 = vmatprep.subr.bf16.mxu0 0
    %168 = vmatpush1.bf16.msra.mxu0 %v148
    %169 = vmatprep.subr.bf16.mxu0 0
    %170 = vmatpush1.bf16.msra.mxu0 %v149
    %171 = vmatprep.subr.bf16.mxu0 0
    %172 = vmatpush1.bf16.msra.mxu0 %v150
    %173 = vmatprep.subr.bf16.mxu0 0
    %174 = vmatpush1.bf16.msra.mxu0 %v151
    %175 = vmatprep.subr.bf16.mxu0 0
    %176 = vmatpush1.bf16.msra.mxu0 %v152
    %177 = vmatprep.subr.bf16.mxu0 0
    %178 = vmatpush1.bf16.msra.mxu0 0
    %179 = vmatprep.subr.bf16.mxu0 0
    %180 = vmatpush1.bf16.msra.mxu0 0
    %181 = vmatprep.subr.bf16.mxu0 0
    %182 = vmatpush1.bf16.msra.mxu0 0
    %183 = vmatprep.subr.bf16.mxu0 0
    %184 = vmatpush1.bf16.msra.mxu0 0
    %185 = vmatprep.subr.bf16.mxu0 0
    %186 = vmatpush1.bf16.msra.mxu0 0
    %187 = vmatprep.subr.bf16.mxu0 0
    %188 = vmatpush1.bf16.msra.mxu0 0
    %189 = vmatprep.subr.bf16.mxu0 0
    %190 = vmatpush1.bf16.msra.mxu0 0
    %191 = vmatprep.subr.bf16.mxu0 0
    %192 = vmatpush1.bf16.msra.mxu0 0
    %193 = vmatprep.mubr.bf16.mxu0 0
    %194 = vmatmul.mubr.bf16.gmra.mrb[0].mxu0 %v111
    %v195 = vpop.f32.mrb[0].mxu0
    %v196 = vadd.f32 %v106, %v195
    %v197 = vpop.f32.mrb[0].mxu0
    %v198 = vpop.f32.mrb[0].mxu0
    %v199 = vadd.f32 %v106, %v198
    %v200 = vpop.f32.mrb[0].mxu0
    %201 = vdwg.mxu0
    %v202 = vmax.f32 %v196, 0.0
    %v203 = vmax.f32 %v199, 0.0
    %v204 = vpack.c.bf16 %v203, %v202
    %v205 = vld [vmem:[#allocation7] sm:$0xf]
    %v206 = vld [vmem:[#allocation7 + $0x4] sm:$0xf]
    %v207 = vld [vmem:[#allocation7 + $0x8] sm:$0xf]
    %v208 = vld [vmem:[#allocation7 + $0xc] sm:$0xf]
    %v209 = vld [vmem:[#allocation7 + $0x10] sm:$0xf]
    %v210 = vld [vmem:[#allocation7 + $0x14] sm:$0xf]
    %v211 = vld [vmem:[#allocation7 + $0x18] sm:$0xf]
    %v212 = vld [vmem:[#allocation7 + $0x1c] sm:$0xf]
    %v213 = vld [vmem:[#allocation7 + $0x20] sm:$0xf]
    %v214 = vld [vmem:[#allocation7 + $0x24] sm:$0xf]
    %v215 = vld [vmem:[#allocation7 + $0x28] sm:$0xf]
    %v216 = vld [vmem:[#allocation7 + $0x2c] sm:$0xf]
    %v217 = vld [vmem:[#allocation7 + $0x30] sm:$0xf]
    %v218 = vld [vmem:[#allocation7 + $0x34] sm:$0xf]
    %v219 = vld [vmem:[#allocation7 + $0x38] sm:$0xf]
    %v220 = vld [vmem:[#allocation7 + $0x3c] sm:$0xf]
    %v221 = vld [vmem:[%s4] sm:$0x1]
    %v222 = vunpack.c.l.bf16 %v221
    %v223 = vlaneseq
    %v224 = vshrl.u32 %v223, 7
    %v225 = vsub.s32 0, %v224
    %v226 = vrot.slane %v222, %v225
    %v243 = vunpack.c.l.b16 %v205
    %v244 = vunpack.c.l.b16 %v206
    %v245 = vunpack.c.l.b16 %v207
    %v246 = vunpack.c.l.b16 %v208
    %v247 = vunpack.c.l.b16 %v209
    %v248 = vunpack.c.l.b16 %v210
    %v249 = vunpack.c.l.b16 %v211
    %v250 = vunpack.c.l.b16 %v212
    %v251 = vunpack.c.l.b16 %v213
    %v252 = vunpack.c.l.b16 %v214
    %v253 = vunpack.c.l.b16 %v215
    %v254 = vunpack.c.l.b16 %v216
    %v255 = vunpack.c.l.b16 %v217
    %v256 = vunpack.c.l.b16 %v218
    %v257 = vunpack.c.l.b16 %v219
    %v258 = vunpack.c.l.b16 %v220
    %v259 = vpack.c.b16 %v244, %v243
    %v260 = vpack.c.b16 %v246, %v245
    %v261 = vpack.c.b16 %v248, %v247
    %v262 = vpack.c.b16 %v250, %v249
    %v263 = vpack.c.b16 %v252, %v251
    %v264 = vpack.c.b16 %v254, %v253
    %v265 = vpack.c.b16 %v256, %v255
    %v266 = vpack.c.b16 %v258, %v257
    %275 = vmatprep.subr.bf16.mxu0 0
    %276 = vmatpush1.bf16.msra.mxu0 %v259
    %277 = vmatprep.subr.bf16.mxu0 0
    %278 = vmatpush1.bf16.msra.mxu0 %v260
    %279 = vmatprep.subr.bf16.mxu0 0
    %280 = vmatpush1.bf16.msra.mxu0 %v261
    %281 = vmatprep.subr.bf16.mxu0 0
    %282 = vmatpush1.bf16.msra.mxu0 %v262
    %283 = vmatprep.subr.bf16.mxu0 0
    %284 = vmatpush1.bf16.msra.mxu0 %v263
    %285 = vmatprep.subr.bf16.mxu0 0
    %286 = vmatpush1.bf16.msra.mxu0 %v264
    %287 = vmatprep.subr.bf16.mxu0 0
    %288 = vmatpush1.bf16.msra.mxu0 %v265
    %289 = vmatprep.subr.bf16.mxu0 0
    %290 = vmatpush1.bf16.msra.mxu0 %v266
    %291 = vmatprep.subr.bf16.mxu0 0
    %292 = vmatpush1.bf16.msra.mxu0 0
    %293 = vmatprep.subr.bf16.mxu0 0
    %294 = vmatpush1.bf16.msra.mxu0 0
    %295 = vmatprep.subr.bf16.mxu0 0
    %296 = vmatpush1.bf16.msra.mxu0 0
    %297 = vmatprep.subr.bf16.mxu0 0
    %298 = vmatpush1.bf16.msra.mxu0 0
    %299 = vmatprep.subr.bf16.mxu0 0
    %300 = vmatpush1.bf16.msra.mxu0 0
    %301 = vmatprep.subr.bf16.mxu0 0
    %302 = vmatpush1.bf16.msra.mxu0 0
    %303 = vmatprep.subr.bf16.mxu0 0
    %304 = vmatpush1.bf16.msra.mxu0 0
    %305 = vmatprep.subr.bf16.mxu0 0
    %306 = vmatpush1.bf16.msra.mxu0 0
    %307 = vmatprep.mubr.bf16.mxu0 0
    %308 = vmatmul.mubr.bf16.gmra.mrb[0].mxu0 %v204
    %v309 = vpop.f32.mrb[0].mxu0
    %v310 = vadd.f32 %v226, %v309
    %v311 = vpop.f32.mrb[0].mxu0
    %v312 = vpop.f32.mrb[0].mxu0
    %v313 = vadd.f32 %v226, %v312
    %v314 = vpop.f32.mrb[0].mxu0
    %315 = vdwg.mxu0
    %v316 = vmax.f32 %v310, 0.0
    %v317 = vmax.f32 %v313, 0.0
    %v318 = vpack.c.bf16 %v317, %v316
    %v319 = vld [vmem:[#allocation8] sm:$0xf]
    %v320 = vld [vmem:[#allocation8 + $0x4] sm:$0xf]
    %v321 = vld [vmem:[#allocation8 + $0x8] sm:$0xf]
    %v322 = vld [vmem:[#allocation8 + $0xc] sm:$0xf]
    %v323 = vld [vmem:[#allocation8 + $0x10] sm:$0xf]
    %v324 = vld [vmem:[#allocation8 + $0x14] sm:$0xf]
    %v325 = vld [vmem:[#allocation8 + $0x18] sm:$0xf]
    %v326 = vld [vmem:[#allocation8 + $0x1c] sm:$0xf]
    %v327 = vld [vmem:[#allocation8 + $0x20] sm:$0xf]
    %v328 = vld [vmem:[#allocation8 + $0x24] sm:$0xf]
    %v329 = vld [vmem:[#allocation8 + $0x28] sm:$0xf]
    %v330 = vld [vmem:[#allocation8 + $0x2c] sm:$0xf]
    %v331 = vld [vmem:[#allocation8 + $0x30] sm:$0xf]
    %v332 = vld [vmem:[#allocation8 + $0x34] sm:$0xf]
    %v333 = vld [vmem:[#allocation8 + $0x38] sm:$0xf]
    %v334 = vld [vmem:[#allocation8 + $0x3c] sm:$0xf]
    %v335 = vld [vmem:[%s6] sm:$0x1]
    %v336 = vunpack.c.l.bf16 %v335
    %v337 = vlaneseq
    %v338 = vshrl.u32 %v337, 7
    %v339 = vsub.s32 0, %v338
    %v340 = vrot.slane %v336, %v339
    %v357 = vunpack.c.l.b16 %v319
    %v358 = vunpack.c.l.b16 %v320
    %v359 = vunpack.c.l.b16 %v321
    %v360 = vunpack.c.l.b16 %v322
    %v361 = vunpack.c.l.b16 %v323
    %v362 = vunpack.c.l.b16 %v324
    %v363 = vunpack.c.l.b16 %v325
    %v364 = vunpack.c.l.b16 %v326
    %v365 = vunpack.c.l.b16 %v327
    %v366 = vunpack.c.l.b16 %v328
    %v367 = vunpack.c.l.b16 %v329
    %v368 = vunpack.c.l.b16 %v330
    %v369 = vunpack.c.l.b16 %v331
    %v370 = vunpack.c.l.b16 %v332
    %v371 = vunpack.c.l.b16 %v333
    %v372 = vunpack.c.l.b16 %v334
    %v373 = vpack.c.b16 %v358, %v357
    %v374 = vpack.c.b16 %v360, %v359
    %v375 = vpack.c.b16 %v362, %v361
    %v376 = vpack.c.b16 %v364, %v363
    %v377 = vpack.c.b16 %v366, %v365
    %v378 = vpack.c.b16 %v368, %v367
    %v379 = vpack.c.b16 %v370, %v369
    %v380 = vpack.c.b16 %v372, %v371
    %389 = vmatprep.subr.bf16.mxu0 0
    %390 = vmatpush1.bf16.msra.mxu0 %v373
    %391 = vmatprep.subr.bf16.mxu0 0
    %392 = vmatpush1.bf16.msra.mxu0 %v374
    %393 = vmatprep.subr.bf16.mxu0 0
    %394 = vmatpush1.bf16.msra.mxu0 %v375
    %395 = vmatprep.subr.bf16.mxu0 0
    %396 = vmatpush1.bf16.msra.mxu0 %v376
    %397 = vmatprep.subr.bf16.mxu0 0
    %398 = vmatpush1.bf16.msra.mxu0 %v377
    %399 = vmatprep.subr.bf16.mxu0 0
    %400 = vmatpush1.bf16.msra.mxu0 %v378
    %401 = vmatprep.subr.bf16.mxu0 0
    %402 = vmatpush1.bf16.msra.mxu0 %v379
    %403 = vmatprep.subr.bf16.mxu0 0
    %404 = vmatpush1.bf16.msra.mxu0 %v380
    %405 = vmatprep.subr.bf16.mxu0 0
    %406 = vmatpush1.bf16.msra.mxu0 0
    %407 = vmatprep.subr.bf16.mxu0 0
    %408 = vmatpush1.bf16.msra.mxu0 0
    %409 = vmatprep.subr.bf16.mxu0 0
    %410 = vmatpush1.bf16.msra.mxu0 0
    %411 = vmatprep.subr.bf16.mxu0 0
    %412 = vmatpush1.bf16.msra.mxu0 0
    %413 = vmatprep.subr.bf16.mxu0 0
    %414 = vmatpush1.bf16.msra.mxu0 0
    %415 = vmatprep.subr.bf16.mxu0 0
    %416 = vmatpush1.bf16.msra.mxu0 0
    %417 = vmatprep.subr.bf16.mxu0 0
    %418 = vmatpush1.bf16.msra.mxu0 0
    %419 = vmatprep.subr.bf16.mxu0 0
    %420 = vmatpush1.bf16.msra.mxu0 0
    %421 = vmatprep.mubr.bf16.mxu0 0
    %422 = vmatmul.mubr.bf16.gmra.mrb[0].mxu0 %v318
    %v423 = vpop.f32.mrb[0].mxu0
    %v424 = vadd.f32 %v340, %v423
    %v425 = vpop.f32.mrb[0].mxu0
    %v426 = vpop.f32.mrb[0].mxu0
    %v427 = vadd.f32 %v340, %v426
    %v428 = vpop.f32.mrb[0].mxu0
    %429 = vdwg.mxu0
    %430 = vst [vmem:[#allocation10] sm:$0xff] %v424
    %431 = vst [vmem:[#allocation10 + $0x8] sm:$0xff] %v427
    // Predicated region
    $region46: #{tpu_custom_call.1} parent=1 // pred_check
      _
    $region47: #{tpu_custom_call.1} parent=1 // pred_check_branch
      %433 = sbr.rel (0) target = $region49
    $region48: #{tpu_custom_call.1} parent=1 // pred_region
      %s435 = ssub.s32 256, 256
      %436 = vsyncadd [#allocation4], %s435
      %s437 = sshll.u32 [#allocation10], 4
      %s438 = int_to_ptr.vmem [resolvable:$true] %s437
      %443 = dma.vmem_to_hbm [thread:$0]  %s438, 256, %s7, [#allocation4], 128, 128, 8
    $region49: #{tpu_custom_call.1} parent=1 // pred_fallthru
      _
    // Predicated region
    $region50: #{tpu_custom_call.1} parent=1 // pred_check
      _
    $region51: #{tpu_custom_call.1} parent=1 // pred_check_branch
      %445 = sbr.rel (0) target = $region53
    $region52: #{tpu_custom_call.1} parent=1 // pred_region
      %446 = dma.done [#allocation4], 256
    $region53: #{tpu_custom_call.1} parent=1 // pred_fallthru
      _
    %447 = vsyncpa [#allocation3], 1
    %448 = vsyncpa [#allocation6], 1
    %449 = vsyncpa [#allocation9], 1
    %450 = vsyncpa [#allocation4], 1

</llo_original>
